<compile_context>
chip_gen: v5e
topology: v5e:2x2
jax: 0.10.0
libtpu: 0.0.40
codegen_flags: <defaults>
</compile_context>

<pallas_src>
import functools

import jax
import jax.numpy as jnp
from jax.experimental import pallas as pl
from jax.experimental.pallas import tpu as pltpu


_TINY = 1e-30      # clamp for logs / divisions of the "other" probability mass


def _round_up(x, m):
    return ((x + m - 1) // m) * m


def _vmem_config():
    """(vmem_limit_bytes, tile-sizing budget) derived from the chip's VMEM."""
    try:
        cap = int(pltpu.get_tpu_info().vmem_capacity_bytes)
    except Exception:
        cap = 64 * 1024 * 1024                      # conservative (v7x per-TC VMEM)
    limit = min((cap * 3) // 4, 96 * 1024 * 1024)   # ~96 MiB v5e/v6e, ~48 MiB v7x
    budget = (limit * 3) // 5                       # headroom for compiler temps
    return limit, budget


def _choose_tb(b, c, itemsize, budget):
    """Batch tile rows: largest tile that fits the VMEM budget, rounded to the
    dtype's sublane packing, capped so the batch grid keeps >= 2 blocks."""
    row_align = 8 if itemsize >= 4 else (16 if itemsize == 2 else 32)
    # Live VMEM per logit row in one grid step: 2 inputs x 2 pipeline buffers
    # (incoming dtype) + ~6 (TB, C) f32 temporaries in the kernel body.
    bytes_per_row = c * (4 * itemsize + 6 * 4)
    tb = (budget // bytes_per_row) // row_align * row_align
    tb = max(row_align, min(tb, 2048))
    # Keep >= 2 batch blocks when possible: pipeline overlap + v7x dual-TC use.
    half = _round_up(max(1, -(-b // 2)), row_align)
    tb = min(tb, half)
    if tb >= b:
        tb = b          # single full-dim batch block (always a legal block shape)
    return tb, bytes_per_row


def _dkd_kernel(ls_ref, lt_ref, tl_ref, out_ref, *, alpha, beta, tau, actual_b):
    ls = ls_ref[...].astype(jnp.float32)           # (TB, C) student logits
    lt = lt_ref[...].astype(jnp.float32)           # (TB, C) teacher logits
    tl = tl_ref[...]                               # (TB, 2) f32 target-class logits
    ls_tgt = tl[:, 0:1]
    lt_tgt = tl[:, 1:2]
    if tau != 1.0:
        inv_tau = 1.0 / tau
        ls = ls * inv_tau
        lt = lt * inv_tau
        ls_tgt = ls_tgt * inv_tau
        lt_tgt = lt_tgt * inv_tau
    tb = ls.shape[0]

    # --- per-tensor softmax stats: one exp per element per tensor -----------
    m_s = jnp.max(ls, axis=1, keepdims=True)
    s_s = jnp.sum(jnp.exp(ls - m_s), axis=1, keepdims=True)
    m_t = jnp.max(lt, axis=1, keepdims=True)
    e_t = jnp.exp(lt - m_t)
    s_t = jnp.sum(e_t, axis=1, keepdims=True)
    # fused weighted logit-difference sum used by the collapsed NCKD term
    s_ed = jnp.sum(e_t * (lt - ls), axis=1, keepdims=True)

    lse_s = m_s + jnp.log(s_s)
    lse_t = m_t + jnp.log(s_t)

    # --- per-row target / "other" stats --------------------------------------
    log_ps_gt = ls_tgt - lse_s
    log_pt_gt = lt_tgt - lse_t
    ps_gt = jnp.exp(log_ps_gt)
    pt_gt = jnp.exp(log_pt_gt)
    ps_ot = jnp.maximum(1.0 - ps_gt, 0.0)
    pt_ot = jnp.maximum(1.0 - pt_gt, 0.0)
    log_ps_ot = jnp.log(jnp.maximum(ps_ot, _TINY))
    log_pt_ot = jnp.log(jnp.maximum(pt_ot, _TINY))

    # --- TCKD: binary [target, other] KL (xlogy-style guard on the 0 case) ---
    tckd = (pt_gt * (log_pt_gt - log_ps_gt)
            + jnp.where(pt_ot > 0.0, pt_ot * (log_pt_ot - log_ps_ot), 0.0))

    # --- NCKD, collapsed:
    #   sum_{j!=t} (pt_j/pt_ot) * [(log_pt_j - log_pt_ot) - (log_ps_j - log_ps_ot)]
    # = (1/pt_ot) * [ s_ed/s_t - pt_gt*(lt_t - ls_t) ]
    #   - (lse_t - lse_s) - (log_pt_ot - log_ps_ot)
    s_other_wd = s_ed / s_t - pt_gt * (lt_tgt - ls_tgt)
    nckd = jnp.where(
        pt_ot > 0.0,
        s_other_wd / jnp.maximum(pt_ot, _TINY)
        - (lse_t - lse_s) - (log_pt_ot - log_ps_ot),
        0.0)

    # --- mask rows of the (possibly partial) edge block ----------------------
    row_ids = (pl.program_id(0) * tb
               + jax.lax.broadcasted_iota(jnp.int32, (tb, 1), 0))
    loss_rows = jnp.where(row_ids < actual_b, alpha * tckd + beta * nckd, 0.0)

    partial = jnp.sum(loss_rows) * (tau * tau)
    out_ref[...] = jnp.full(out_ref.shape, partial, dtype=out_ref.dtype)


def dkd_loss(logits_student, logits_teacher, target, *, alpha=1.0, beta=1.0, tau=1.0):
    """DKD forward pass. Returns a scalar float32 loss."""
    # Glue: mirror PyTorch's `.view(b, c)` for 4-D (B, C, 1, 1) inputs.
    if logits_student.ndim == 4:
        b, c = logits_student.shape[:2]
        logits_student = logits_student.reshape(b, c)
    if logits_teacher.ndim == 4:
        b, c = logits_teacher.shape[:2]
        logits_teacher = logits_teacher.reshape(b, c)
    B, C = logits_student.shape

    # Hoist the target-class logit gather out of the kernel (tiny (B, 2) side input).
    tgt_idx = target.reshape(-1).astype(jnp.int32)[:, None]
    ls_tgt = jnp.take_along_axis(logits_student, tgt_idx, axis=1)
    lt_tgt = jnp.take_along_axis(logits_teacher, tgt_idx, axis=1)
    tgt_logits = jnp.concatenate([ls_tgt, lt_tgt], axis=1).astype(jnp.float32)

    vmem_limit, budget = _vmem_config()
    tb, bytes_per_row = _choose_tb(B, C, logits_student.dtype.itemsize, budget)
    nb = pl.cdiv(B, tb)
    vmem_limit = max(vmem_limit, tb * bytes_per_row + (2 << 20))
    # TODO(synk): add a class-dim grid axis with online-softmax accumulation for
    # extreme vocab sizes (C >~ 10^5) where even an 8-row full-C block overflows VMEM.

    kernel = functools.partial(
        _dkd_kernel, alpha=float(alpha), beta=float(beta), tau=float(tau),
        actual_b=int(B))

    partials = pl.pallas_call(
        kernel,
        out_shape=jax.ShapeDtypeStruct((nb, 8, 128), jnp.float32),
        grid=(nb,),
        in_specs=[
            pl.BlockSpec((tb, C), lambda i: (i, 0)),   # student logits (incoming dtype)
            pl.BlockSpec((tb, C), lambda i: (i, 0)),   # teacher logits (incoming dtype)
            pl.BlockSpec((tb, 2), lambda i: (i, 0)),   # gathered target-class logits
        ],
        # Lane-dense per-block partial loss; batch axis shardable across TCs.
        out_specs=pl.BlockSpec((1, 8, 128), lambda i: (i, 0, 0)),
        compiler_params=pltpu.CompilerParams(
            dimension_semantics=("parallel",),
            vmem_limit_bytes=int(vmem_limit)),
    )(logits_student, logits_teacher, tgt_logits)

    return jnp.sum(partials[:, 0, 0]) / B


def _dkd_reference(logits_student, logits_teacher, target, alpha=1.0, beta=1.0, tau=1.0):
    """Pure-JAX reference (direct translation of the PyTorch module)."""
    if logits_student.ndim == 4:
        b, c = logits_student.shape[:2]
        logits_student = logits_student.reshape(b, c)
    if logits_teacher.ndim == 4:
        b, c = logits_teacher.shape[:2]
        logits_teacher = logits_teacher.reshape(b, c)
    B, C = logits_student.shape
    logits_student = logits_student.astype(jnp.float32)
    logits_teacher = logits_teacher.astype(jnp.float32)
    gt = jax.nn.one_hot(target, C, dtype=jnp.float32)
    other = 1.0 - gt
    ps = jax.nn.softmax(logits_student / tau, axis=1)
    pt = jax.nn.softmax(logits_teacher / tau, axis=1)
    ps2 = jnp.stack([jnp.sum(ps * gt, 1), jnp.sum(ps * other, 1)], axis=1)
    pt2 = jnp.stack([jnp.sum(pt * gt, 1), jnp.sum(pt * other, 1)], axis=1)
    tckd = jnp.sum(pt2 * (jnp.log(pt2) - jnp.log(ps2))) / B * tau ** 2
    lt_m = logits_teacher / tau - 1000.0 * gt
    ls_m = logits_student / tau - 1000.0 * gt
    pt_p2 = jax.nn.softmax(lt_m, axis=1)
    log_ps_p2 = jax.nn.log_softmax(ls_m, axis=1)
    terms = jnp.where(pt_p2 > 0.0, pt_p2 * (jnp.log(pt_p2) - log_ps_p2), 0.0)
    nckd = jnp.sum(terms) / B * tau ** 2
    return alpha * tckd + beta * nckd


if __name__ == "__main__":
    key = jax.random.PRNGKey(0)
    k1, k2, k3, k4, k5, k6, k7, k8, k9 = jax.random.split(key, 9)

    # Case 1: 4-D conv-head logits (B, C, 1, 1), default alpha/beta/tau.
    B1, C1 = 8, 16
    s1 = jax.random.normal(k1, (B1, C1, 1, 1), dtype=jnp.float32)
    t1 = jax.random.normal(k2, (B1, C1, 1, 1), dtype=jnp.float32)
    y1 = jax.random.randint(k3, (B1,), 0, C1, dtype=jnp.int32)
    loss1 = jax.block_until_ready(dkd_loss(s1, t1, y1, alpha=1.0, beta=1.0, tau=1.0))
    ref1 = _dkd_reference(s1, t1, y1, alpha=1.0, beta=1.0, tau=1.0)
    assert jnp.allclose(loss1, ref1, rtol=2e-4, atol=1e-5), (loss1, ref1)

    # Case 2: 2-D logits, C not a multiple of 128 (full-C block, no padding),
    # B not a multiple of the batch tile (partial edge block + row masking),
    # non-default alpha/beta/tau.
    B2, C2 = 12, 100
    s2 = 3.0 * jax.random.normal(k4, (B2, C2), dtype=jnp.float32)
    t2 = 3.0 * jax.random.normal(k5, (B2, C2), dtype=jnp.float32)
    y2 = jax.random.randint(k6, (B2,), 0, C2, dtype=jnp.int32)
    loss2 = jax.block_until_ready(dkd_loss(s2, t2, y2, alpha=1.5, beta=0.5, tau=4.0))
    ref2 = _dkd_reference(s2, t2, y2, alpha=1.5, beta=0.5, tau=4.0)
    assert jnp.allclose(loss2, ref2, rtol=2e-4, atol=1e-5), (loss2, ref2)

    # Case 3: bf16 logits stay bf16 on the wire (sub-32-bit sublane packing path).
    B3, C3 = 16, 200
    s3 = (2.0 * jax.random.normal(k7, (B3, C3), dtype=jnp.float32)).astype(jnp.bfloat16)
    t3 = (2.0 * jax.random.normal(k8, (B3, C3), dtype=jnp.float32)).astype(jnp.bfloat16)
    y3 = jax.random.randint(k9, (B3,), 0, C3, dtype=jnp.int32)
    loss3 = jax.block_until_ready(dkd_loss(s3, t3, y3, alpha=1.0, beta=2.0, tau=2.0))
    ref3 = _dkd_reference(s3, t3, y3, alpha=1.0, beta=2.0, tau=2.0)
    assert jnp.allclose(loss3, ref3, rtol=1e-3, atol=1e-4), (loss3, ref3)

    print("KERNEL_OK")
</pallas_src>

<mosaic_0001>
module attributes {stable_mosaic.version = 11 : i64} {
  func.func @_dkd_kernel(%arg0: i32, %arg1: memref<8x16xf32, #tpu.memory_space<vmem>>, %arg2: memref<8x16xf32, #tpu.memory_space<vmem>>, %arg3: memref<8x2xf32, #tpu.memory_space<vmem>>, %arg4: memref<1x8x128xf32, #tpu.memory_space<vmem>>) attributes {dimension_semantics = [#tpu.dimension_semantics<parallel>], iteration_bounds = array<i64: 1>, scalar_prefetch = 0 : i64, scratch_operands = 0 : i64, tpu.core_type = #tpu.core_type<tc>, window_params = [{transform_indices = @transform_0, window_bounds = array<i64: 8, 16>}, {transform_indices = @transform_1, window_bounds = array<i64: 8, 16>}, {transform_indices = @transform_2, window_bounds = array<i64: 8, 2>}, {transform_indices = @transform_3, window_bounds = array<i64: 1, 8, 128>}]} {
    %c0 = arith.constant 0 : index
    %c0_0 = arith.constant 0 : index
    %0 = vector.load %arg1[%c0, %c0_0] : memref<8x16xf32, #tpu.memory_space<vmem>>, vector<8x16xf32>
    %c0_1 = arith.constant 0 : index
    %c0_2 = arith.constant 0 : index
    %1 = vector.load %arg2[%c0_1, %c0_2] : memref<8x16xf32, #tpu.memory_space<vmem>>, vector<8x16xf32>
    %c0_3 = arith.constant 0 : index
    %c0_4 = arith.constant 0 : index
    %2 = vector.load %arg3[%c0_3, %c0_4] : memref<8x2xf32, #tpu.memory_space<vmem>>, vector<8x2xf32>
    %3 = vector.extract_strided_slice %2 {offsets = [0, 0], sizes = [8, 1], strides = [1, 1]} : vector<8x2xf32> to vector<8x1xf32>
    %4 = vector.extract_strided_slice %2 {offsets = [0, 1], sizes = [8, 1], strides = [1, 1]} : vector<8x2xf32> to vector<8x1xf32>
    %cst = arith.constant dense<0xFF800000> : vector<8xf32>
    %5 = vector.multi_reduction <maximumf>, %0, %cst [1] : vector<8x16xf32> to vector<8xf32>
    %6 = vector.shape_cast %5 : vector<8xf32> to vector<8x1xf32>
    %7 = vector.broadcast %6 : vector<8x1xf32> to vector<8x16xf32>
    %8 = arith.subf %0, %7 : vector<8x16xf32>
    %9 = math.exp %8 : vector<8x16xf32>
    %cst_5 = arith.constant dense<0.000000e+00> : vector<8xf32>
    %10 = vector.multi_reduction <add>, %9, %cst_5 [1] : vector<8x16xf32> to vector<8xf32>
    %11 = vector.shape_cast %10 : vector<8xf32> to vector<8x1xf32>
    %cst_6 = arith.constant dense<0xFF800000> : vector<8xf32>
    %12 = vector.multi_reduction <maximumf>, %1, %cst_6 [1] : vector<8x16xf32> to vector<8xf32>
    %13 = vector.shape_cast %12 : vector<8xf32> to vector<8x1xf32>
    %14 = vector.broadcast %13 : vector<8x1xf32> to vector<8x16xf32>
    %15 = arith.subf %1, %14 : vector<8x16xf32>
    %16 = math.exp %15 : vector<8x16xf32>
    %cst_7 = arith.constant dense<0.000000e+00> : vector<8xf32>
    %17 = vector.multi_reduction <add>, %16, %cst_7 [1] : vector<8x16xf32> to vector<8xf32>
    %18 = vector.shape_cast %17 : vector<8xf32> to vector<8x1xf32>
    %19 = arith.subf %1, %0 : vector<8x16xf32>
    %20 = arith.mulf %16, %19 : vector<8x16xf32>
    %cst_8 = arith.constant dense<0.000000e+00> : vector<8xf32>
    %21 = vector.multi_reduction <add>, %20, %cst_8 [1] : vector<8x16xf32> to vector<8xf32>
    %22 = vector.shape_cast %21 : vector<8xf32> to vector<8x1xf32>
    %23 = math.log %11 : vector<8x1xf32>
    %24 = arith.addf %6, %23 : vector<8x1xf32>
    %25 = math.log %18 : vector<8x1xf32>
    %26 = arith.addf %13, %25 : vector<8x1xf32>
    %27 = arith.subf %3, %24 : vector<8x1xf32>
    %28 = arith.subf %4, %26 : vector<8x1xf32>
    %29 = math.exp %27 : vector<8x1xf32>
    %30 = math.exp %28 : vector<8x1xf32>
    %cst_9 = arith.constant 1.000000e+00 : f32
    %31 = vector.broadcast %cst_9 : f32 to vector<8x1xf32>
    %32 = arith.subf %31, %29 : vector<8x1xf32>
    %cst_10 = arith.constant 0.000000e+00 : f32
    %33 = vector.broadcast %cst_10 : f32 to vector<8x1xf32>
    %34 = arith.maximumf %32, %33 : vector<8x1xf32>
    %cst_11 = arith.constant 1.000000e+00 : f32
    %35 = vector.broadcast %cst_11 : f32 to vector<8x1xf32>
    %36 = arith.subf %35, %30 : vector<8x1xf32>
    %cst_12 = arith.constant 0.000000e+00 : f32
    %37 = vector.broadcast %cst_12 : f32 to vector<8x1xf32>
    %38 = arith.maximumf %36, %37 : vector<8x1xf32>
    %cst_13 = arith.constant 1.000000e-30 : f32
    %39 = vector.broadcast %cst_13 : f32 to vector<8x1xf32>
    %40 = arith.maximumf %34, %39 : vector<8x1xf32>
    %41 = math.log %40 : vector<8x1xf32>
    %cst_14 = arith.constant 1.000000e-30 : f32
    %42 = vector.broadcast %cst_14 : f32 to vector<8x1xf32>
    %43 = arith.maximumf %38, %42 : vector<8x1xf32>
    %44 = math.log %43 : vector<8x1xf32>
    %45 = arith.subf %28, %27 : vector<8x1xf32>
    %46 = arith.mulf %30, %45 : vector<8x1xf32>
    %cst_15 = arith.constant 0.000000e+00 : f32
    %47 = vector.broadcast %cst_15 : f32 to vector<8x1xf32>
    %48 = arith.cmpf ogt, %38, %47 : vector<8x1xf32>
    %49 = arith.subf %44, %41 : vector<8x1xf32>
    %50 = arith.mulf %38, %49 : vector<8x1xf32>
    %cst_16 = arith.constant 0.000000e+00 : f32
    %51 = vector.broadcast %cst_16 : f32 to vector<8x1xf32>
    %52 = arith.select %48, %50, %51 : vector<8x1xi1>, vector<8x1xf32>
    %53 = arith.addf %46, %52 : vector<8x1xf32>
    %54 = arith.divf %22, %18 : vector<8x1xf32>
    %55 = arith.subf %4, %3 : vector<8x1xf32>
    %56 = arith.mulf %30, %55 : vector<8x1xf32>
    %57 = arith.subf %54, %56 : vector<8x1xf32>
    %cst_17 = arith.constant 0.000000e+00 : f32
    %58 = vector.broadcast %cst_17 : f32 to vector<8x1xf32>
    %59 = arith.cmpf ogt, %38, %58 : vector<8x1xf32>
    %cst_18 = arith.constant 1.000000e-30 : f32
    %60 = vector.broadcast %cst_18 : f32 to vector<8x1xf32>
    %61 = arith.maximumf %38, %60 : vector<8x1xf32>
    %62 = arith.divf %57, %61 : vector<8x1xf32>
    %63 = arith.subf %26, %24 : vector<8x1xf32>
    %64 = arith.subf %62, %63 : vector<8x1xf32>
    %65 = arith.subf %44, %41 : vector<8x1xf32>
    %66 = arith.subf %64, %65 : vector<8x1xf32>
    %cst_19 = arith.constant 0.000000e+00 : f32
    %67 = vector.broadcast %cst_19 : f32 to vector<8x1xf32>
    %68 = arith.select %59, %66, %67 : vector<8x1xi1>, vector<8x1xf32>
    %c8_i32 = arith.constant 8 : i32
    %69 = arith.muli %arg0, %c8_i32 : i32
    %70 = tpu.iota {dimensions = array<i32: 0>} : vector<8x1xi32>
    %71 = vector.broadcast %69 : i32 to vector<8x1xi32>
    %72 = arith.addi %71, %70 : vector<8x1xi32>
    %c8_i32_20 = arith.constant 8 : i32
    %73 = vector.broadcast %c8_i32_20 : i32 to vector<8x1xi32>
    %74 = arith.cmpi slt, %72, %73 : vector<8x1xi32>
    %cst_21 = arith.constant 1.000000e+00 : f32
    %75 = vector.broadcast %cst_21 : f32 to vector<8x1xf32>
    %76 = arith.mulf %75, %53 : vector<8x1xf32>
    %cst_22 = arith.constant 1.000000e+00 : f32
    %77 = vector.broadcast %cst_22 : f32 to vector<8x1xf32>
    %78 = arith.mulf %77, %68 : vector<8x1xf32>
    %79 = arith.addf %76, %78 : vector<8x1xf32>
    %cst_23 = arith.constant 0.000000e+00 : f32
    %80 = vector.broadcast %cst_23 : f32 to vector<8x1xf32>
    %81 = arith.select %74, %79, %80 : vector<8x1xi1>, vector<8x1xf32>
    %82 = vector.shape_cast %81 : vector<8x1xf32> to vector<1x8x1xf32>
    %cst_24 = arith.constant dense<0.000000e+00> : vector<1xf32>
    %83 = vector.multi_reduction <add>, %82, %cst_24 [1, 2] : vector<1x8x1xf32> to vector<1xf32>
    %84 = vector.shape_cast %83 : vector<1xf32> to vector<1x1x1xf32>
    %85 = vector.extract %84[0, 0, 0] : f32 from vector<1x1x1xf32>
    %cst_25 = arith.constant 1.000000e+00 : f32
    %86 = arith.mulf %85, %cst_25 : f32
    %87 = vector.broadcast %86 : f32 to vector<1x8x128xf32>
    %c0_26 = arith.constant 0 : index
    %c0_27 = arith.constant 0 : index
    %c0_28 = arith.constant 0 : index
    %88 = vector.load %arg4[%c0_26, %c0_27, %c0_28] : memref<1x8x128xf32, #tpu.memory_space<vmem>>, vector<1x8x128xf32>
    tpu.vector_store %arg4[%c0_26, %c0_27, %c0_28], %87 {strides = array<i32>} : memref<1x8x128xf32, #tpu.memory_space<vmem>>, vector<1x8x128xf32>,
    return
  }
  func.func @transform_0(%arg0: i32) -> (i32, i32) {
    %c0_i32 = arith.constant 0 : i32
    %c0_i32_0 = arith.constant 0 : i32
    return %arg0, %c0_i32 : i32, i32
  }
  func.func @transform_1(%arg0: i32) -> (i32, i32) {
    %c0_i32 = arith.constant 0 : i32
    %c0_i32_0 = arith.constant 0 : i32
    return %arg0, %c0_i32 : i32, i32
  }
  func.func @transform_2(%arg0: i32) -> (i32, i32) {
    %c0_i32 = arith.constant 0 : i32
    %c0_i32_0 = arith.constant 0 : i32
    return %arg0, %c0_i32 : i32, i32
  }
  func.func @transform_3(%arg0: i32) -> (i32, i32, i32) {
    %c0_i32 = arith.constant 0 : i32
    %c0_i32_0 = arith.constant 0 : i32
    %c0_i32_1 = arith.constant 0 : i32
    return %arg0, %c0_i32, %c0_i32_0 : i32, i32, i32
  }
}

</mosaic_0001>

<llo_original>
// kernel: tpu_custom_call.1
$region0: #{tpu_custom_call.1}
  #allocation0 [shape = 'u32[]', space=smem, size = 0x4, offset = 0x4, fixed_abs, tag = 'smem constant byte address 0x4 - core index']
  #allocation1 [shape = 'u32[72,128]{1,0:T(1,128)}', space=vmem, size = 0x9000, scoped, tag = 'internal scratch']
  %s0 = inlined_call_operand.vmem [shape: f32[8,16], index: 0, kind: input, shape index: {}]
  %s1 = inlined_call_operand.hbm [shape: f32[8,16], index: 1, kind: input, shape index: {}]
  %s2 = inlined_call_operand.vmem [shape: f32[8,2], index: 2, kind: input, shape index: {}]
  %s3 = inlined_call_operand.hbm [shape: f32[1,8,128], index: 3, kind: output, shape index: {}]
  %s4 = sld [smem:[#allocation0]]
  $region26: #{tpu_custom_call.1} parent=0
    _
  %s6 = ssub.s32 1, %s4
  %s7 = scalar_select 0, %s6, %s4
  $region1: #{tpu_custom_call.1} parent=0
    #allocation2 [shape = 'u8[4096]{0}', space=vmem, size = 0x1000, scoped, tag = 'input window, operand 1, single buffered']
    #allocation3 [shape = 's32[1]{0}', space=sflag, size = 0x4, scoped, tag = 'scoped memory for tpu_custom_call.1']
    #allocation4 [shape = 's32[1]{0}', space=sflag, size = 0x4, scoped, tag = 'scoped memory for tpu_custom_call.1']
    #allocation5 [shape = 'u8[4096]{0}', space=vmem, size = 0x1000, scoped, tag = 'output window, operand 0, single buffered']
    %8 = vsyncpa [#allocation3], 0
    %9 = vsyncpa [#allocation4], 0
    // Predicated region
    $region2: #{tpu_custom_call.1} parent=1 // pred_check
      _
    $region3: #{tpu_custom_call.1} parent=1 // pred_check_branch
      %11 = sbr.rel (0) target = $region5
    $region4: #{tpu_custom_call.1} parent=1 // pred_region
      _
    $region5: #{tpu_custom_call.1} parent=1 // pred_fallthru
      _
    // Predicated region
    $region6: #{tpu_custom_call.1} parent=1 // pred_check
      _
    $region7: #{tpu_custom_call.1} parent=1 // pred_check_branch
      %13 = sbr.rel (0) target = $region9
    $region8: #{tpu_custom_call.1} parent=1 // pred_region
      %15 = vsyncadd [#allocation3], 0
      %s17 = sshll.u32 %s1, 4
      %s18 = int_to_ptr.hbm [resolvable:$true] %s17
      %s19 = sshll.u32 [#allocation2], 4
      %s20 = int_to_ptr.vmem [resolvable:$true] %s19
      %22 = dma.hbm_to_vmem [thread:$0]  %s18, 128, %s20, [#allocation3]
    $region9: #{tpu_custom_call.1} parent=1 // pred_fallthru
      _
    // Predicated region
    $region10: #{tpu_custom_call.1} parent=1 // pred_check
      _
    $region11: #{tpu_custom_call.1} parent=1 // pred_check_branch
      %24 = sbr.rel (0) target = $region13
    $region12: #{tpu_custom_call.1} parent=1 // pred_region
      _
    $region13: #{tpu_custom_call.1} parent=1 // pred_fallthru
      _
    // Predicated region
    $region14: #{tpu_custom_call.1} parent=1 // pred_check
      _
    $region15: #{tpu_custom_call.1} parent=1 // pred_check_branch
      %26 = sbr.rel (0) target = $region17
    $region16: #{tpu_custom_call.1} parent=1 // pred_region
      %28 = dma.done [#allocation3], 128
    $region17: #{tpu_custom_call.1} parent=1 // pred_fallthru
      _
    %v29 = vld [vmem:[%s0] sm:$0xff]
    %v30 = vld [vmem:[#allocation2] sm:$0xff]
    %v31 = vld [vmem:[%s2] sm:$0xff]
    %vm32 = vcmask 130048
    %v33 = vsel %vm32, %v29, -inf
    %34 = vmax.xlane.f32.xlu0 %v33
    %v35 = vpop.xlane.xlu0 %34
    %v36 = vsub.f32 %v29, %v35
    %v37 = vmul.f32 %v36, 1.442695
    %v38 = vpow.pop %v37
    %v39 = vsel %vm32, %v38, 0.0
    %40 = vadd.xlane.f32.xlu0 %v39
    %v41 = vpop.xlane.xlu0 %40
    %v42 = vsel %vm32, %v30, -inf
    %43 = vmax.xlane.f32.xlu0 %v42
    %v44 = vpop.xlane.xlu0 %43
    %v45 = vsub.f32 %v30, %v44
    %v46 = vmul.f32 %v45, 1.442695
    %v47 = vpow.pop %v46
    %v48 = vsel %vm32, %v47, 0.0
    %49 = vadd.xlane.f32.xlu0 %v48
    %v50 = vpop.xlane.xlu0 %49
    %v51 = vsub.f32 %v30, %v29
    %v52 = vmul.f32 %v47, %v51
    %v53 = vsel %vm32, %v52, 0.0
    %54 = vadd.xlane.f32.xlu0 %v53
    %v55 = vpop.xlane.xlu0 %54
    %v56 = vlog2.pop %v41
    %v57 = vmul.f32 %v56, 0.6931472
    %v58 = vadd.f32 %v35, %v57
    %v59 = vlog2.pop %v50
    %v60 = vmul.f32 %v59, 0.6931472
    %v61 = vadd.f32 %v44, %v60
    %v62 = vsub.f32 %v31, %v58
    %v63 = vsub.f32 %v31, %v61
    %v64 = vmul.f32 %v62, 1.442695
    %v65 = vpow.pop %v64
    %v66 = vmul.f32 %v63, 1.442695
    %v67 = vpow.pop %v66
    %v68 = vsub.f32 1.0, %v65
    %v69 = vmax.f32 %v68, 0.0
    %v70 = vsub.f32 1.0, %v67
    %v71 = vmax.f32 %v70, 0.0
    %v72 = vmax.f32 %v69, 1e-30
    %v73 = vlog2.pop %v72
    %v74 = vmul.f32 %v73, 0.6931472
    %v75 = vmax.f32 %v71, 1e-30
    %v76 = vlog2.pop %v75
    %v77 = vmul.f32 %v76, 0.6931472
    %79 = vrot.lane.b32.xlu0 %v62, 1
    %v80 = vpop.permute.xlu0 %79
    %v82 = vsub.f32 %v63, %v80
    %v83 = vmul.f32 %v67, %v82
    %vm84 = vcmp.gt.f32.partialorder %v71, 0.0
    %86 = vrot.lane.b32.xlu0 %v74, 1
    %v87 = vpop.permute.xlu0 %86
    %v89 = vsub.f32 %v77, %v87
    %v90 = vmul.f32 %v71, %v89
    %v91 = vsel %vm84, %v90, 0.0
    %v92 = vadd.f32 %v83, %v91
    %v93 = vrcp.pop %v50
    %v94 = vmul.f32 %v50, %v93
    %v95 = vsub.f32 1.0, %v94
    %v96 = vmul.f32 %v93, %v95
    %v97 = vadd.f32 %v93, %v96
    %vm98 = vweird.f32 %v50
    %vm99 = vweird.f32 %v93
    %vm100 = vmor %vm98, %vm99
    %v101 = vsel %vm100, %v93, %v97
    %v102 = vand.u32 2147483647, %v50
    %vm103 = vcmp.eq.f32.partialorder %v102, 8.507059e+37
    %v104 = vand.u32 %v50, 2147483648
    %v105 = vor.u32 1.1754944e-38, %v104
    %v106 = vsel %vm103, %v105, %v101
    %v107 = vmul.f32 %v55, %v106
    %109 = vrot.lane.b32.xlu0 %v31, 1
    %v110 = vpop.permute.xlu0 %109
    %v112 = vsub.f32 %v31, %v110
    %v113 = vmul.f32 %v67, %v112
    %v114 = vsub.f32 %v107, %v113
    %v115 = vrcp.pop %v75
    %v116 = vmul.f32 %v75, %v115
    %v117 = vsub.f32 1.0, %v116
    %v118 = vmul.f32 %v115, %v117
    %v119 = vadd.f32 %v115, %v118
    %vm120 = vweird.f32 %v75
    %vm121 = vweird.f32 %v115
    %vm122 = vmor %vm120, %vm121
    %v123 = vsel %vm122, %v115, %v119
    %v124 = vand.u32 2147483647, %v75
    %vm125 = vcmp.eq.f32.partialorder %v124, 8.507059e+37
    %v126 = vand.u32 %v75, 2147483648
    %v127 = vor.u32 1.1754944e-38, %v126
    %v128 = vsel %vm125, %v127, %v123
    %v129 = vmul.f32 %v114, %v128
    %v130 = vsub.f32 %v61, %v58
    %v131 = vsub.f32 %v129, %v130
    %v132 = vsub.f32 %v131, %v89
    %v133 = vsel %vm84, %v132, 0.0
    %s134 = smul.u32 0, 8
    %v135 = vlaneseq
    %v136 = vshrl.u32 %v135, 7
    %v137 = vstv %s134
    %v138 = vadd.s32 %v137, %v136
    %vm139 = vcmp.lt.s32.totalorder %v138, 8
    %v140 = vadd.f32 %v92, %v133
    %v141 = vsel %vm139, %v140, 0.0
    %143 = vrot.lane.b32.xlu0 %v141, 127
    %v144 = vpop.permute.xlu0 %143
    %vm146 = vcmask 7168
    %v147 = vsel %vm146, %v144, 0.0
    %148 = vadd.xlane.f32.xlu0 %v147
    %v149 = vpop.xlane.xlu0 %148
    %v150 = vrot.slane %v149, 4
    %v151 = vadd.f32 %v149, %v150
    %v152 = vrot.slane %v151, 2
    %v153 = vadd.f32 %v151, %v152
    %v154 = vrot.slane %v153, 1
    %v155 = vadd.f32 %v153, %v154
    %s156 = vtos %v155
    %v157 = vstv %s156
    %158 = vst [vmem:[#allocation5] sm:$0xff] %v157
    // Predicated region
    $region18: #{tpu_custom_call.1} parent=1 // pred_check
      _
    $region19: #{tpu_custom_call.1} parent=1 // pred_check_branch
      %160 = sbr.rel (0) target = $region21
    $region20: #{tpu_custom_call.1} parent=1 // pred_region
      %162 = vsyncadd [#allocation4], 0
      %s164 = sshll.u32 [#allocation5], 4
      %s165 = int_to_ptr.vmem [resolvable:$true] %s164
      %s166 = sshll.u32 %s3, 4
      %s167 = int_to_ptr.hbm [resolvable:$true] %s166
      %169 = dma.vmem_to_hbm [thread:$0]  %s165, 128, %s167, [#allocation4]
    $region21: #{tpu_custom_call.1} parent=1 // pred_fallthru
      _
    // Predicated region
    $region22: #{tpu_custom_call.1} parent=1 // pred_check
      _
    $region23: #{tpu_custom_call.1} parent=1 // pred_check_branch
      %171 = sbr.rel (0) target = $region25
    $region24: #{tpu_custom_call.1} parent=1 // pred_region
      %173 = dma.done [#allocation4], 128
    $region25: #{tpu_custom_call.1} parent=1 // pred_fallthru
      _
    %174 = vsyncpa [#allocation3], 1
    %175 = vsyncpa [#allocation4], 1

</llo_original>
